<compile_context>
chip_gen: v5e
topology: v5e:2x2
jax: 0.10.0
libtpu: 0.0.40
codegen_flags: <defaults>
</compile_context>

<pallas_src>
import jax
import jax.numpy as jnp
from jax.experimental import pallas as pl
from jax.experimental.pallas import tpu as pltpu


def _gff_kernel(xa_ref, xb_ref, wa_ref, wb_ref, o_ref):
    # One matmul per branch: rows [:Cout] are the 1x1-conv output,
    # rows [Cout:] are that branch's contribution to the gate logits.
    ra = jnp.dot(wa_ref[...], xa_ref[...], preferred_element_type=jnp.float32)
    rb = jnp.dot(wb_ref[...], xb_ref[...], preferred_element_type=jnp.float32)

    cout = o_ref.shape[0]                     # out block is (Cout, t)
    a = ra[:cout, :]                          # conv_A(feat_A)   (Cout, t)
    b = rb[:cout, :]                          # conv_B(feat_B)   (Cout, t)

    # gate(cat([A, B])) == (Wg_a@Wa)@Xa + (Wg_b@Wb)@Xb  -> rows [Cout:]
    g = jax.nn.sigmoid(ra[cout:, :] + rb[cout:, :])     # (2, t), EUP
    gate_a = g[0:1, :]                                  # broadcast over Cout
    gate_b = g[1:2, :]

    o_ref[...] = (gate_a * a + gate_b * b).astype(o_ref.dtype)


def gated_feature_fusion(feat_A, feat_B, w_A, w_B, w_gate, *, tile_hw=2048):
    """feat_A: (N, Ca, H, W), feat_B: (N, Cb, H, W) — PyTorch NCHW.

    w_A:    (Cout, Ca, 1, 1)   conv_A.weight   (bias=False in the module)
    w_B:    (Cout, Cb, 1, 1)   conv_B.weight
    w_gate: (2, 2*Cout, 1, 1)  gate.weight
    returns (N, Cout, H, W)
    """
    N, Ca, H, W = feat_A.shape
    Nb, Cb, Hb, Wb = feat_B.shape
    assert (N, H, W) == (Nb, Hb, Wb)
    Cout = w_A.shape[0]
    HW = H * W

    # ---- weight prep (tiny, once per call, in f32 / highest precision) ----
    hp = jax.lax.Precision.HIGHEST
    Wa = w_A.reshape(Cout, Ca).astype(jnp.float32)
    Wb_ = w_B.reshape(Cout, Cb).astype(jnp.float32)
    Wg = w_gate.reshape(2, 2 * Cout).astype(jnp.float32)
    Wag = jnp.dot(Wg[:, :Cout], Wa, precision=hp)       # (2, Ca)
    Wbg = jnp.dot(Wg[:, Cout:], Wb_, precision=hp)      # (2, Cb)
    wa_full = jnp.concatenate([Wa, Wag], axis=0)        # (Cout+2, Ca)
    wb_full = jnp.concatenate([Wb_, Wbg], axis=0)       # (Cout+2, Cb)

    # ---- activations stay NCHW; spatial dims merged (free reshape) --------
    xa = feat_A.reshape(N, Ca, HW)
    xb = feat_B.reshape(N, Cb, HW)

    # Spatial (lane) tile: multiple of 128, or the full extent if it fits.
    t = min(tile_hw, HW)
    if t < HW:
        t = max(128, (t // 128) * 128)
    HW_p = pl.cdiv(HW, t) * t
    if HW_p != HW:
        pad = HW_p - HW
        xa = jnp.pad(xa, ((0, 0), (0, 0), (0, pad)))
        xb = jnp.pad(xb, ((0, 0), (0, 0), (0, pad)))

    grid = (N, HW_p // t)

    itemsize = jnp.dtype(feat_A.dtype).itemsize
    cost = pl.CostEstimate(
        flops=2 * N * HW_p * (Ca + Cb) * (Cout + 2),
        transcendentals=2 * N * HW_p,
        bytes_accessed=itemsize * N * HW_p * (Ca + Cb + Cout),
    )

    out = pl.pallas_call(
        _gff_kernel,
        out_shape=jax.ShapeDtypeStruct((N, Cout, HW_p), feat_A.dtype),
        grid_spec=pltpu.PrefetchScalarGridSpec(
            num_scalar_prefetch=0,
            grid=grid,
            in_specs=[
                pl.BlockSpec((pl.Squeezed(), Ca, t), lambda n, s: (n, 0, s)),
                pl.BlockSpec((pl.Squeezed(), Cb, t), lambda n, s: (n, 0, s)),
                pl.BlockSpec((Cout + 2, Ca), lambda n, s: (0, 0)),
                pl.BlockSpec((Cout + 2, Cb), lambda n, s: (0, 0)),
            ],
            out_specs=pl.BlockSpec((pl.Squeezed(), Cout, t),
                                   lambda n, s: (n, 0, s)),
        ),
        compiler_params=pltpu.CompilerParams(
            dimension_semantics=("parallel", "parallel")),
        cost_estimate=cost,
    )(xa, xb, wa_full, wb_full)

    if HW_p != HW:
        out = out[:, :, :HW]
    return out.reshape(N, Cout, H, W)     # already NCHW — no transpose


def _reference(feat_A, feat_B, w_A, w_B, w_gate):
    """Pure-JAX reference mirroring the PyTorch forward (NCHW 1x1 convs)."""
    Cout = w_A.shape[0]
    a = jnp.einsum("nchw,oc->nohw", feat_A, w_A.reshape(Cout, -1))
    b = jnp.einsum("nchw,oc->nohw", feat_B, w_B.reshape(Cout, -1))
    cat = jnp.concatenate([a, b], axis=1)
    g = jax.nn.sigmoid(jnp.einsum("nchw,oc->nohw", cat, w_gate.reshape(2, -1)))
    gate_a = g[:, 0:1]
    gate_b = g[:, 1:2]
    return gate_a * a + gate_b * b


if __name__ == "__main__":
    key = jax.random.PRNGKey(0)
    k1, k2, k3, k4, k5 = jax.random.split(key, 5)

    N, H, W = 2, 16, 16
    in_channels_A, in_channels_B, out_channels = 4, 8, 16

    feat_A = jax.random.normal(k1, (N, in_channels_A, H, W), dtype=jnp.float32)
    feat_B = jax.random.normal(k2, (N, in_channels_B, H, W), dtype=jnp.float32)

    # Deterministic synthetic parameters matching nn.Conv2d weight shapes.
    w_A = 0.1 * jax.random.normal(k3, (out_channels, in_channels_A, 1, 1), jnp.float32)
    w_B = 0.1 * jax.random.normal(k4, (out_channels, in_channels_B, 1, 1), jnp.float32)
    w_gate = 0.1 * jax.random.normal(k5, (2, out_channels * 2, 1, 1), jnp.float32)

    out = gated_feature_fusion(feat_A, feat_B, w_A, w_B, w_gate)
    out = jax.block_until_ready(out)

    ref = _reference(feat_A, feat_B, w_A, w_B, w_gate)
    assert out.shape == (N, out_channels, H, W)
    # Gate-fold changes fp associativity slightly vs the two-stage reference.
    assert jnp.allclose(out, ref, atol=1e-4, rtol=1e-4), "mismatch vs reference"

    print("KERNEL_OK")
</pallas_src>

<mosaic_0001>
module attributes {stable_mosaic.version = 11 : i64} {
  func.func @_gff_kernel(%arg0: i32, %arg1: i32, %arg2: memref<1x4x256xf32, #tpu.memory_space<vmem>>, %arg3: memref<1x8x256xf32, #tpu.memory_space<vmem>>, %arg4: memref<18x4xf32, #tpu.memory_space<vmem>>, %arg5: memref<18x8xf32, #tpu.memory_space<vmem>>, %arg6: memref<1x16x256xf32, #tpu.memory_space<vmem>>) attributes {dimension_semantics = [#tpu.dimension_semantics<parallel>, #tpu.dimension_semantics<parallel>], iteration_bounds = array<i64: 2, 1>, scalar_prefetch = 0 : i64, scratch_operands = 0 : i64, tpu.core_type = #tpu.core_type<tc>, window_params = [{transform_indices = @transform_0, window_bounds = array<i64: 1, 4, 256>}, {transform_indices = @transform_1, window_bounds = array<i64: 1, 8, 256>}, {pipeline_mode = #tpu.pipeline_mode<synchronous>, transform_indices = @transform_2, window_bounds = array<i64: 18, 4>}, {pipeline_mode = #tpu.pipeline_mode<synchronous>, transform_indices = @transform_3, window_bounds = array<i64: 18, 8>}, {transform_indices = @transform_4, window_bounds = array<i64: 1, 16, 256>}]} {
    %c0 = arith.constant 0 : index
    %c0_0 = arith.constant 0 : index
    %0 = vector.load %arg4[%c0, %c0_0] : memref<18x4xf32, #tpu.memory_space<vmem>>, vector<18x4xf32>
    %c0_1 = arith.constant 0 : index
    %c0_2 = arith.constant 0 : index
    %c0_3 = arith.constant 0 : index
    %1 = vector.load %arg2[%c0_1, %c0_2, %c0_3] : memref<1x4x256xf32, #tpu.memory_space<vmem>>, vector<1x4x256xf32>
    %2 = vector.shape_cast %1 : vector<1x4x256xf32> to vector<4x256xf32>
    %cst = arith.constant dense<0.000000e+00> : vector<18x256xf32>
    %3 = tpu.matmul %0, %2, %cst {dimension_numbers = #tpu.dot_dimension_numbers<[1], [0], [0], [1], [0, 0, 1, 1], [], []>} : vector<18x4xf32>, vector<4x256xf32>, vector<18x256xf32> -> vector<18x256xf32>
    %c0_4 = arith.constant 0 : index
    %c0_5 = arith.constant 0 : index
    %4 = vector.load %arg5[%c0_4, %c0_5] : memref<18x8xf32, #tpu.memory_space<vmem>>, vector<18x8xf32>
    %c0_6 = arith.constant 0 : index
    %c0_7 = arith.constant 0 : index
    %c0_8 = arith.constant 0 : index
    %5 = vector.load %arg3[%c0_6, %c0_7, %c0_8] : memref<1x8x256xf32, #tpu.memory_space<vmem>>, vector<1x8x256xf32>
    %6 = vector.shape_cast %5 : vector<1x8x256xf32> to vector<8x256xf32>
    %cst_9 = arith.constant dense<0.000000e+00> : vector<18x256xf32>
    %7 = tpu.matmul %4, %6, %cst_9 {dimension_numbers = #tpu.dot_dimension_numbers<[1], [0], [0], [1], [0, 0, 1, 1], [], []>} : vector<18x8xf32>, vector<8x256xf32>, vector<18x256xf32> -> vector<18x256xf32>
    %8 = vector.extract_strided_slice %3 {offsets = [0, 0], sizes = [16, 256], strides = [1, 1]} : vector<18x256xf32> to vector<16x256xf32>
    %9 = vector.extract_strided_slice %7 {offsets = [0, 0], sizes = [16, 256], strides = [1, 1]} : vector<18x256xf32> to vector<16x256xf32>
    %10 = vector.extract_strided_slice %3 {offsets = [16, 0], sizes = [2, 256], strides = [1, 1]} : vector<18x256xf32> to vector<2x256xf32>
    %11 = vector.extract_strided_slice %7 {offsets = [16, 0], sizes = [2, 256], strides = [1, 1]} : vector<18x256xf32> to vector<2x256xf32>
    %12 = arith.addf %10, %11 : vector<2x256xf32>
    %13 = arith.negf %12 : vector<2x256xf32>
    %14 = math.exp %13 : vector<2x256xf32>
    %cst_10 = arith.constant 1.000000e+00 : f32
    %15 = vector.broadcast %cst_10 : f32 to vector<2x256xf32>
    %16 = arith.addf %15, %14 : vector<2x256xf32>
    %17 = arith.divf %15, %16 : vector<2x256xf32>
    %18 = vector.extract_strided_slice %17 {offsets = [0, 0], sizes = [1, 256], strides = [1, 1]} : vector<2x256xf32> to vector<1x256xf32>
    %19 = vector.extract_strided_slice %17 {offsets = [1, 0], sizes = [1, 256], strides = [1, 1]} : vector<2x256xf32> to vector<1x256xf32>
    %20 = vector.broadcast %18 : vector<1x256xf32> to vector<16x256xf32>
    %21 = arith.mulf %20, %8 : vector<16x256xf32>
    %22 = vector.broadcast %19 : vector<1x256xf32> to vector<16x256xf32>
    %23 = arith.mulf %22, %9 : vector<16x256xf32>
    %24 = arith.addf %21, %23 : vector<16x256xf32>
    %c0_11 = arith.constant 0 : index
    %c0_12 = arith.constant 0 : index
    %c0_13 = arith.constant 0 : index
    %25 = vector.load %arg6[%c0_11, %c0_12, %c0_13] : memref<1x16x256xf32, #tpu.memory_space<vmem>>, vector<1x16x256xf32>
    %26 = vector.shape_cast %25 : vector<1x16x256xf32> to vector<16x256xf32>
    %27 = vector.shape_cast %24 : vector<16x256xf32> to vector<1x16x256xf32>
    tpu.vector_store %arg6[%c0_11, %c0_12, %c0_13], %27 {strides = array<i32>} : memref<1x16x256xf32, #tpu.memory_space<vmem>>, vector<1x16x256xf32>,
    return
  }
  func.func @transform_0(%arg0: i32, %arg1: i32) -> (i32, i32, i32) {
    %c0_i32 = arith.constant 0 : i32
    %c0_i32_0 = arith.constant 0 : i32
    return %arg0, %c0_i32, %arg1 : i32, i32, i32
  }
  func.func @transform_1(%arg0: i32, %arg1: i32) -> (i32, i32, i32) {
    %c0_i32 = arith.constant 0 : i32
    %c0_i32_0 = arith.constant 0 : i32
    return %arg0, %c0_i32, %arg1 : i32, i32, i32
  }
  func.func @transform_2(%arg0: i32, %arg1: i32) -> (i32, i32) {
    %c0_i32 = arith.constant 0 : i32
    %c0_i32_0 = arith.constant 0 : i32
    %c0_i32_1 = arith.constant 0 : i32
    return %c0_i32, %c0_i32_0 : i32, i32
  }
  func.func @transform_3(%arg0: i32, %arg1: i32) -> (i32, i32) {
    %c0_i32 = arith.constant 0 : i32
    %c0_i32_0 = arith.constant 0 : i32
    %c0_i32_1 = arith.constant 0 : i32
    return %c0_i32, %c0_i32_0 : i32, i32
  }
  func.func @transform_4(%arg0: i32, %arg1: i32) -> (i32, i32, i32) {
    %c0_i32 = arith.constant 0 : i32
    %c0_i32_0 = arith.constant 0 : i32
    return %arg0, %c0_i32, %arg1 : i32, i32, i32
  }
}

</mosaic_0001>

<llo_original>
// kernel: tpu_custom_call.1
$region0: #{tpu_custom_call.1}
  #allocation0 [shape = 'u32[]', space=smem, size = 0x4, offset = 0x4, fixed_abs, tag = 'smem constant byte address 0x4 - core index']
  #allocation1 [shape = 'u32[72,128]{1,0:T(1,128)}', space=vmem, size = 0x9000, scoped, tag = 'internal scratch']
  %s0 = inlined_call_operand.vmem [shape: f32[2,4,256], index: 0, kind: input, shape index: {}]
  %s1 = inlined_call_operand.vmem [shape: f32[2,8,256], index: 1, kind: input, shape index: {}]
  %s2 = inlined_call_operand.vmem [shape: f32[18,4], index: 2, kind: input, shape index: {}]
  %s3 = inlined_call_operand.vmem [shape: f32[18,8], index: 3, kind: input, shape index: {}]
  %s4 = inlined_call_operand.hbm [shape: f32[2,16,256], index: 4, kind: output, shape index: {}]
  %s5 = sld [smem:[#allocation0]]
  $region49: #{tpu_custom_call.1} parent=0
    _
  %s7 = ssub.s32 1, %s5
  %s8 = scalar_select 0, %s7, %s5
  $region1: #{tpu_custom_call.1} parent=0
    #allocation2 [shape = 'u8[32768]{0}', space=vmem, size = 0x8000, scoped, tag = 'output window, operand 0']
    #allocation3 [shape = 's32[2]{0}', space=sflag, size = 0x8, scoped, tag = 'scoped memory for tpu_custom_call.1']
    %9 = vsyncpa [#allocation3], 0
    %s10 = scalar_lea.sflag [#allocation3], 1
    %11 = vsyncpa %s10, 0
    loop: start=0, step=1, limit=4
    $region2: #{tpu_custom_call.1} parent=1 // loop_pre_header
      _
    $region3: #{tpu_custom_call.1} parent=1 // loop_header
      %s13 = sphi 0, %s17
      %p14 = scmp.ge.s32.totalorder %s13, 4
      %s20 = sphi 0, %s32
      %s21 = sphi 0, %s28
      %s22 = sphi 0, %s20
      %s23 = sphi 0, %s21
      %s24 = sphi 0, %s22
      %s25 = sphi 0, %s23
      %s37 = sphi 0, %s39
      %s40 = sphi 0, %s37
      %s41 = sphi 0, %s40
      %s57 = sphi 0, %s41
      %s65 = sphi 0, %s67
      %s68 = sphi 0, %s65
      %s69 = sphi 0, %s68
      %s85 = sphi 0, %s69
      %s89 = sphi 0, %s89
      %s91 = sphi 0, %s89
      %s92 = sphi 0, %s91
      %s106 = sphi 0, %s92
      %s110 = sphi 0, %s110
      %s112 = sphi 0, %s110
      %s113 = sphi 0, %s112
      %s127 = sphi 0, %s113
      %s135 = sphi 0, %s137
      %s138 = sphi 0, %s135
      %s139 = sphi 0, %s138
      %s155 = sphi 0, %s139
    $region4: #{tpu_custom_call.1} parent=1 // loop_header_branch
      %16 = sbr.rel (%p14) target = $region8
    $region5: #{tpu_custom_call.1} parent=1 // loop_body
      %s18 = ssub.s32 %s13, 1
      %s19 = ssub.s32 %s13, 2
      %s26 = sadd.s32 1, %s21
      %p27 = scmp.ge.s32.totalorder %s26, 1
      %s28 = scalar_select %p27, 0, %s26
      %s29 = sadd.s32 1, %s20
      %s30 = scalar_select %p27, %s29, %s20
      %p31 = scmp.ge.s32.totalorder %s30, 2
      %s32 = scalar_select %p31, 0, %s30
      %s33 = ssub.s32 %s20, %s32
      %s34 = ssub.s32 %s21, %s28
      %s35 = sor.u32 %s33, %s34
      %p36 = scmp.eq.s32.totalorder %s35, 0
      %s38 = sadd.s32 %s37, 1
      %s39 = scalar_select %p36, %s37, %s38
      %p42 = pneg %p36
      %p43 = scmp.eq.s32.totalorder %s13, 1
      %p44 = por %p42, %p43
      %p45 = scmp.ne.s32.totalorder %s37, %s40
      %p46 = scmp.eq.s32.totalorder %s13, 0
      %p47 = por %p45, %p46
      %p48 = scmp.ne.s32.totalorder %s37, %s40
      %p49 = scmp.eq.s32.totalorder %s18, 1
      %p50 = por %p48, %p49
      %p51 = scmp.ne.s32.totalorder %s40, %s41
      %p52 = scmp.eq.s32.totalorder %s18, 0
      %p53 = por %p51, %p52
      %p54 = scmp.ne.s32.totalorder %s40, %s41
      %p55 = scmp.eq.s32.totalorder %s19, 1
      %p56 = por %p54, %p55
      %p58 = scmp.ne.s32.totalorder %s41, %s57
      %p59 = scmp.eq.s32.totalorder %s19, 0
      %p60 = por %p58, %p59
      %s61 = ssub.s32 %s20, %s32
      %s62 = ssub.s32 %s21, %s28
      %s63 = sor.u32 %s61, %s62
      %p64 = scmp.eq.s32.totalorder %s63, 0
      %s66 = sadd.s32 %s65, 1
      %s67 = scalar_select %p64, %s65, %s66
      %p70 = pneg %p64
      %p71 = scmp.eq.s32.totalorder %s13, 1
      %p72 = por %p70, %p71
      %p73 = scmp.ne.s32.totalorder %s65, %s68
      %p74 = scmp.eq.s32.totalorder %s13, 0
      %p75 = por %p73, %p74
      %p76 = scmp.ne.s32.totalorder %s65, %s68
      %p77 = scmp.eq.s32.totalorder %s18, 1
      %p78 = por %p76, %p77
      %p79 = scmp.ne.s32.totalorder %s68, %s69
      %p80 = scmp.eq.s32.totalorder %s18, 0
      %p81 = por %p79, %p80
      %p82 = scmp.ne.s32.totalorder %s68, %s69
      %p83 = scmp.eq.s32.totalorder %s19, 1
      %p84 = por %p82, %p83
      %p86 = scmp.ne.s32.totalorder %s69, %s85
      %p87 = scmp.eq.s32.totalorder %s19, 0
      %p88 = por %p86, %p87
      %s90 = sadd.s32 %s89, 1
      %p93 = scmp.eq.s32.totalorder %s13, 1
      %p94 = scmp.ne.s32.totalorder %s89, %s91
      %p95 = scmp.eq.s32.totalorder %s13, 0
      %p96 = por %p94, %p95
      %p97 = scmp.ne.s32.totalorder %s89, %s91
      %p98 = scmp.eq.s32.totalorder %s18, 1
      %p99 = por %p97, %p98
      %p100 = scmp.ne.s32.totalorder %s91, %s92
      %p101 = scmp.eq.s32.totalorder %s18, 0
      %p102 = por %p100, %p101
      %p103 = scmp.ne.s32.totalorder %s91, %s92
      %p104 = scmp.eq.s32.totalorder %s19, 1
      %p105 = por %p103, %p104
      %p107 = scmp.ne.s32.totalorder %s92, %s106
      %p108 = scmp.eq.s32.totalorder %s19, 0
      %p109 = por %p107, %p108
      %s111 = sadd.s32 %s110, 1
      %p114 = scmp.eq.s32.totalorder %s13, 1
      %p115 = scmp.ne.s32.totalorder %s110, %s112
      %p116 = scmp.eq.s32.totalorder %s13, 0
      %p117 = por %p115, %p116
      %p118 = scmp.ne.s32.totalorder %s110, %s112
      %p119 = scmp.eq.s32.totalorder %s18, 1
      %p120 = por %p118, %p119
      %p121 = scmp.ne.s32.totalorder %s112, %s113
      %p122 = scmp.eq.s32.totalorder %s18, 0
      %p123 = por %p121, %p122
      %p124 = scmp.ne.s32.totalorder %s112, %s113
      %p125 = scmp.eq.s32.totalorder %s19, 1
      %p126 = por %p124, %p125
      %p128 = scmp.ne.s32.totalorder %s113, %s127
      %p129 = scmp.eq.s32.totalorder %s19, 0
      %p130 = por %p128, %p129
      %s131 = ssub.s32 %s20, %s32
      %s132 = ssub.s32 %s21, %s28
      %s133 = sor.u32 %s131, %s132
      %p134 = scmp.eq.s32.totalorder %s133, 0
      %s136 = sadd.s32 %s135, 1
      %s137 = scalar_select %p134, %s135, %s136
      %p140 = pneg %p134
      %p141 = scmp.eq.s32.totalorder %s13, 1
      %p142 = por %p140, %p141
      %p143 = scmp.ne.s32.totalorder %s135, %s138
      %p144 = scmp.eq.s32.totalorder %s13, 0
      %p145 = por %p143, %p144
      %p146 = scmp.ne.s32.totalorder %s135, %s138
      %p147 = scmp.eq.s32.totalorder %s18, 1
      %p148 = por %p146, %p147
      %p149 = scmp.ne.s32.totalorder %s138, %s139
      %p150 = scmp.eq.s32.totalorder %s18, 0
      %p151 = por %p149, %p150
      %p152 = scmp.ne.s32.totalorder %s138, %s139
      %p153 = scmp.eq.s32.totalorder %s19, 1
      %p154 = por %p152, %p153
      %p156 = scmp.ne.s32.totalorder %s139, %s155
      %p157 = scmp.eq.s32.totalorder %s19, 0
      %p158 = por %p156, %p157
      %p159 = scmp.le.s32.totalorder 1, %s13
      %p160 = scmp.lt.s32.totalorder %s13, 3
      %p161 = pnand %p159, %p160
      %p162 = pneg %p161
      // Predicated region
      $region9: #{tpu_custom_call.1} parent=5 // pred_check
        _
      $region10: #{tpu_custom_call.1} parent=5 // pred_check_branch
        %164 = sbr.rel (%p161) target = $region12
      $region11: #{tpu_custom_call.1} parent=5 // pred_region
        %s165 = ssub.s32 %s13, 1
        // Predicated region
        $region13: #{tpu_custom_call.1} parent=11 // pred_check
          %p166 = pneg %p102
        $region14: #{tpu_custom_call.1} parent=11 // pred_check_branch
          %168 = sbr.rel (%p166) target = $region16
        $region15: #{tpu_custom_call.1} parent=11 // pred_region
          _
        $region16: #{tpu_custom_call.1} parent=11 // pred_fallthru
          _
        // Predicated region
        $region17: #{tpu_custom_call.1} parent=11 // pred_check
          %p169 = pneg %p123
        $region18: #{tpu_custom_call.1} parent=11 // pred_check_branch
          %171 = sbr.rel (%p169) target = $region20
        $region19: #{tpu_custom_call.1} parent=11 // pred_region
          _
        $region20: #{tpu_custom_call.1} parent=11 // pred_fallthru
          _
      $region12: #{tpu_custom_call.1} parent=5 // pred_fallthru
        _
      %p172 = scmp.lt.s32.totalorder %s13, 2
      // Predicated region
      $region21: #{tpu_custom_call.1} parent=5 // pred_check
        %p173 = pneg %p172
      $region22: #{tpu_custom_call.1} parent=5 // pred_check_branch
        %175 = sbr.rel (%p173) target = $region24
      $region23: #{tpu_custom_call.1} parent=5 // pred_region
        // Predicated region
        $region25: #{tpu_custom_call.1} parent=23 // pred_check
          %p176 = pneg %p47
        $region26: #{tpu_custom_call.1} parent=23 // pred_check_branch
          %178 = sbr.rel (%p176) target = $region28
        $region27: #{tpu_custom_call.1} parent=23 // pred_region
          %s179 = smul.u32 2, %s21
          %p180 = scmp.lt.s32.totalorder %s20, 1
          %s181 = scalar_select %p180, %s20, 1
          %p182 = scmp.lt.s32.totalorder %s179, 1
          %s183 = scalar_select %p182, %s179, 1
          %s184 = smul.addr %s181, 2
          %s185 = sadd.s32 %s183, %s184
          %s186 = smul.addr %s185, 4
          %s187 = scalar_lea.vmem %s0, %s186
          %s188 = smul.u32 2, %s21
        $region28: #{tpu_custom_call.1} parent=23 // pred_fallthru
          _
        // Predicated region
        $region29: #{tpu_custom_call.1} parent=23 // pred_check
          %p189 = pneg %p75
        $region30: #{tpu_custom_call.1} parent=23 // pred_check_branch
          %191 = sbr.rel (%p189) target = $region32
        $region31: #{tpu_custom_call.1} parent=23 // pred_region
          %s192 = smul.u32 2, %s21
          %p193 = scmp.lt.s32.totalorder %s20, 1
          %s194 = scalar_select %p193, %s20, 1
          %p195 = scmp.lt.s32.totalorder %s192, 1
          %s196 = scalar_select %p195, %s192, 1
          %s197 = smul.addr %s194, 2
          %s198 = sadd.s32 %s196, %s197
          %s199 = smul.addr %s198, 8
          %s200 = scalar_lea.vmem %s1, %s199
          %s201 = smul.u32 2, %s21
        $region32: #{tpu_custom_call.1} parent=23 // pred_fallthru
          _
      $region24: #{tpu_custom_call.1} parent=5 // pred_fallthru
        _
      %p202 = scmp.le.s32.totalorder 1, %s13
      %p203 = scmp.lt.s32.totalorder %s13, 3
      %p204 = pnand %p202, %p203
      %p205 = pneg %p204
      // Predicated region
      $region33: #{tpu_custom_call.1} parent=5 // pred_check
        _
      $region34: #{tpu_custom_call.1} parent=5 // pred_check_branch
        %207 = sbr.rel (%p204) target = $region36
      $region35: #{tpu_custom_call.1} parent=5 // pred_region
        %s208 = ssub.s32 %s13, 1
        %s209 = smul.u32 2, %s23
        %p210 = scmp.lt.s32.totalorder %s22, 1
        %s211 = scalar_select %p210, %s22, 1
        %p212 = scmp.lt.s32.totalorder %s209, 1
        %s213 = scalar_select %p212, %s209, 1
        %s214 = smul.addr %s211, 2
        %s215 = sadd.s32 %s213, %s214
        %s216 = smul.addr %s215, 4
        %s217 = scalar_lea.vmem %s0, %s216
        %p218 = pneg %p53
        %p219 = pneg %p50
        %s220 = smul.u32 2, %s23
        %p221 = scmp.lt.s32.totalorder %s22, 1
        %s222 = scalar_select %p221, %s22, 1
        %p223 = scmp.lt.s32.totalorder %s220, 1
        %s224 = scalar_select %p223, %s220, 1
        %s225 = smul.addr %s222, 2
        %s226 = sadd.s32 %s224, %s225
        %s227 = smul.addr %s226, 8
        %s228 = scalar_lea.vmem %s1, %s227
        %p229 = pneg %p81
        %p230 = pneg %p78
        %p231 = pneg %p102
        %p232 = pneg %p99
        %p233 = pneg %p123
        %p234 = pneg %p120
        %p235 = pneg %p151
        %p236 = pneg %p148
        %s237 = sand.u32 %s138, 1
        %s238 = scalar_lea.sflag [#allocation3], %s237
        %s239 = sand.u32 %s138, 1
        %s240 = smul.addr %s239, 32
        %s241 = scalar_lea.vmem [#allocation2], %s240
        %s242 = smul.u32 2, %s23
        %p243 = scmp.lt.s32.totalorder %s22, 1
        %s244 = scalar_select %p243, %s22, 1
        %p245 = scmp.lt.s32.totalorder %s242, 1
        %s246 = scalar_select %p245, %s242, 1
        %s247 = smul.addr %s244, 2
        %s248 = sadd.s32 %s246, %s247
        %s249 = smul.addr %s248, 4
        %s250 = scalar_lea.vmem %s0, %s249
        %s251 = smul.u32 2, %s23
        %s252 = smul.u32 2, %s23
        %p253 = scmp.lt.s32.totalorder %s22, 1
        %s254 = scalar_select %p253, %s22, 1
        %p255 = scmp.lt.s32.totalorder %s252, 1
        %s256 = scalar_select %p255, %s252, 1
        %s257 = smul.addr %s254, 2
        %s258 = sadd.s32 %s256, %s257
        %s259 = smul.addr %s258, 8
        %s260 = scalar_lea.vmem %s1, %s259
        %s261 = smul.u32 2, %s23
        %s262 = smul.u32 2, %s23
        %v263 = vld [vmem:[%s2] sm:$0xff]
        %v264 = vld [vmem:[%s2 + $0x8] sm:$0xff]
        %v265 = vld [vmem:[%s2 + $0x10] sm:$0x3]
        %v266 = vld [vmem:[%s250] sm:$0xff]
        %268 = vst [vmem:[#allocation1] ss:$2 sm:$0xff] %v266
        %v269 = vld.sshfl [vmem:[#allocation1] sm:$0xff pattern:$0x75316420]
        %v270 = vld.sshfl [vmem:[#allocation1 + $0x8] sm:$0xff pattern:$0x75316420]
        %vm271 = vcmask 31744
        %v273 = vsel %vm271, %v263, 0
        %v276 = vsel %vm271, %v264, 0
        %v279 = vsel %vm271, %v265, 0
        %vm281 = vcmask 1043456
        %v282 = vsel %vm281, %v269, 0
        %v284 = vsel %vm281, %v270, 0
        %286 = vmatpush.msra.mxu0 0.0
        %287 = vmatpush.msra.mxu0 0.0
        %288 = vmatpush.msra.mxu0 0.0
        %289 = vmatpush.msra.mxu0 0.0
        %290 = vmatpush.msra.mxu0 0.0
        %291 = vmatpush.msra.mxu0 0.0
        %292 = vmatpush.msra.mxu0 0.0
        %293 = vmatpush.msra.mxu0 0.0
        %294 = vmatpush.msra.mxu0 0.0
        %295 = vmatpush.msra.mxu0 0.0
        %296 = vmatpush.msra.mxu0 0.0
        %297 = vmatpush.msra.mxu0 0.0
        %298 = vmatpush.msra.mxu0 0.0
        %299 = vmatpush.msra.mxu0 0.0
        %300 = vmatpush.msra.mxu0 0.0
        %301 = vmatpush.msra.mxu0 %v282
        %302 = vmatmul.f32.gmra.mxu0 %v273
        %v303 = vpop.f32.mrf.mxu0
        %v304 = vadd.f32 0.0, %v303
        %305 = vmatmul.f32.gmra.mxu0 %v276
        %v306 = vpop.f32.mrf.mxu0
        %v307 = vadd.f32 0.0, %v306
        %308 = vmatmul.f32.gmra.mxu0 %v279
        %v309 = vpop.f32.mrf.mxu0
        %v310 = vadd.f32 0.0, %v309
        %311 = vdwg.mxu0
        %312 = vmatpush.msra.mxu0 0.0
        %313 = vmatpush.msra.mxu0 0.0
        %314 = vmatpush.msra.mxu0 0.0
        %315 = vmatpush.msra.mxu0 0.0
        %316 = vmatpush.msra.mxu0 0.0
        %317 = vmatpush.msra.mxu0 0.0
        %318 = vmatpush.msra.mxu0 0.0
        %319 = vmatpush.msra.mxu0 0.0
        %320 = vmatpush.msra.mxu0 0.0
        %321 = vmatpush.msra.mxu0 0.0
        %322 = vmatpush.msra.mxu0 0.0
        %323 = vmatpush.msra.mxu0 0.0
        %324 = vmatpush.msra.mxu0 0.0
        %325 = vmatpush.msra.mxu0 0.0
        %326 = vmatpush.msra.mxu0 0.0
        %327 = vmatpush.msra.mxu0 %v284
        %328 = vmatmul.f32.gmra.mxu0 %v273
        %v329 = vpop.f32.mrf.mxu0
        %v330 = vadd.f32 0.0, %v329
        %331 = vmatmul.f32.gmra.mxu0 %v276
        %v332 = vpop.f32.mrf.mxu0
        %v333 = vadd.f32 0.0, %v332
        %334 = vmatmul.f32.gmra.mxu0 %v279
        %v335 = vpop.f32.mrf.mxu0
        %v336 = vadd.f32 0.0, %v335
        %337 = vdwg.mxu0
        %v338 = vld [vmem:[%s3] sm:$0xff]
        %v339 = vld [vmem:[%s3 + $0x8] sm:$0xff]
        %v340 = vld [vmem:[%s3 + $0x10] sm:$0x3]
        %v341 = vld [vmem:[%s260] sm:$0xff]
        %v342 = vld [vmem:[%s260 + $0x8] sm:$0xff]
        %vm343 = vcmask 64512
        %v345 = vsel %vm343, %v338, 0
        %v348 = vsel %vm343, %v339, 0
        %v351 = vsel %vm343, %v340, 0
        %353 = vmatpush.msra.mxu0 0.0
        %354 = vmatpush.msra.mxu0 0.0
        %355 = vmatpush.msra.mxu0 0.0
        %356 = vmatpush.msra.mxu0 0.0
        %357 = vmatpush.msra.mxu0 0.0
        %358 = vmatpush.msra.mxu0 0.0
        %359 = vmatpush.msra.mxu0 0.0
        %360 = vmatpush.msra.mxu0 0.0
        %361 = vmatpush.msra.mxu0 0.0
        %362 = vmatpush.msra.mxu0 0.0
        %363 = vmatpush.msra.mxu0 0.0
        %364 = vmatpush.msra.mxu0 0.0
        %365 = vmatpush.msra.mxu0 0.0
        %366 = vmatpush.msra.mxu0 0.0
        %367 = vmatpush.msra.mxu0 0.0
        %368 = vmatpush.msra.mxu0 %v341
        %369 = vmatmul.f32.gmra.mxu0 %v345
        %v370 = vpop.f32.mrf.mxu0
        %v371 = vadd.f32 0.0, %v370
        %372 = vmatmul.f32.gmra.mxu0 %v348
        %v373 = vpop.f32.mrf.mxu0
        %v374 = vadd.f32 0.0, %v373
        %375 = vmatmul.f32.gmra.mxu0 %v351
        %v376 = vpop.f32.mrf.mxu0
        %v377 = vadd.f32 0.0, %v376
        %378 = vdwg.mxu0
        %379 = vmatpush.msra.mxu0 0.0
        %380 = vmatpush.msra.mxu0 0.0
        %381 = vmatpush.msra.mxu0 0.0
        %382 = vmatpush.msra.mxu0 0.0
        %383 = vmatpush.msra.mxu0 0.0
        %384 = vmatpush.msra.mxu0 0.0
        %385 = vmatpush.msra.mxu0 0.0
        %386 = vmatpush.msra.mxu0 0.0
        %387 = vmatpush.msra.mxu0 0.0
        %388 = vmatpush.msra.mxu0 0.0
        %389 = vmatpush.msra.mxu0 0.0
        %390 = vmatpush.msra.mxu0 0.0
        %391 = vmatpush.msra.mxu0 0.0
        %392 = vmatpush.msra.mxu0 0.0
        %393 = vmatpush.msra.mxu0 0.0
        %394 = vmatpush.msra.mxu0 %v342
        %395 = vmatmul.f32.gmra.mxu0 %v345
        %v396 = vpop.f32.mrf.mxu0
        %v397 = vadd.f32 0.0, %v396
        %398 = vmatmul.f32.gmra.mxu0 %v348
        %v399 = vpop.f32.mrf.mxu0
        %v400 = vadd.f32 0.0, %v399
        %401 = vmatmul.f32.gmra.mxu0 %v351
        %v402 = vpop.f32.mrf.mxu0
        %v403 = vadd.f32 0.0, %v402
        %404 = vdwg.mxu0
        %v405 = vadd.f32 %v310, %v377
        %v406 = vadd.f32 %v336, %v403
        %v407 = vxor.u32 %v405, 2147483648
        %v408 = vxor.u32 %v406, 2147483648
        %v409 = vmul.f32 %v407, 1.442695
        %v410 = vpow.pop %v409
        %v411 = vmul.f32 %v408, 1.442695
        %v412 = vpow.pop %v411
        %v413 = vadd.f32 %v410, 1.0
        %v414 = vadd.f32 %v412, 1.0
        %v415 = vrcp.pop %v413
        %v416 = vmul.f32 %v413, %v415
        %v417 = vsub.f32 1.0, %v416
        %v418 = vmul.f32 %v415, %v417
        %v419 = vadd.f32 %v415, %v418
        %vm420 = vweird.f32 %v413
        %vm421 = vweird.f32 %v415
        %vm422 = vmor %vm420, %vm421
        %v423 = vsel %vm422, %v415, %v419
        %v424 = vand.u32 2147483647, %v413
        %vm425 = vcmp.eq.f32.partialorder %v424, 8.507059e+37
        %v426 = vand.u32 %v413, 2147483648
        %v427 = vor.u32 1.1754944e-38, %v426
        %v428 = vsel %vm425, %v427, %v423
        %v429 = vmul.f32 1.0, %v428
        %v430 = vrcp.pop %v414
        %v431 = vmul.f32 %v414, %v430
        %v432 = vsub.f32 1.0, %v431
        %v433 = vmul.f32 %v430, %v432
        %v434 = vadd.f32 %v430, %v433
        %vm435 = vweird.f32 %v414
        %vm436 = vweird.f32 %v430
        %vm437 = vmor %vm435, %vm436
        %v438 = vsel %vm437, %v430, %v434
        %v439 = vand.u32 2147483647, %v414
        %vm440 = vcmp.eq.f32.partialorder %v439, 8.507059e+37
        %v441 = vand.u32 %v414, 2147483648
        %v442 = vor.u32 1.1754944e-38, %v441
        %v443 = vsel %vm440, %v442, %v438
        %v444 = vmul.f32 1.0, %v443
        %v445 = vperm.slane %v429, 0
        %v446 = vperm.slane %v444, 0
        %v447 = vmul.f32 %v445, %v304
        %v448 = vmul.f32 %v446, %v330
        %v449 = vmul.f32 %v445, %v307
        %v450 = vmul.f32 %v446, %v333
        %v451 = vperm.slane %v429, 1
        %v452 = vperm.slane %v444, 1
        %v453 = vmul.f32 %v451, %v371
        %v454 = vmul.f32 %v452, %v397
        %v455 = vmul.f32 %v451, %v374
        %v456 = vmul.f32 %v452, %v400
        %v457 = vadd.f32 %v447, %v453
        %v458 = vadd.f32 %v448, %v454
        %v459 = vadd.f32 %v449, %v455
        %v460 = vadd.f32 %v450, %v456
        %461 = vst [vmem:[%s241] sm:$0xff] %v457
        %462 = vst [vmem:[%s241 + $0x8] sm:$0xff] %v458
        %463 = vst [vmem:[%s241 + $0x10] sm:$0xff] %v459
        %464 = vst [vmem:[%s241 + $0x18] sm:$0xff] %v460
        %s465 = sand.u32 %s138, 1
        %s466 = scalar_lea.sflag [#allocation3], %s465
        %s467 = sand.u32 %s138, 1
        %s468 = smul.addr %s467, 32
        %s469 = scalar_lea.vmem [#allocation2], %s468
        // Predicated region
        $region37: #{tpu_custom_call.1} parent=35 // pred_check
          %p470 = pneg %p148
        $region38: #{tpu_custom_call.1} parent=35 // pred_check_branch
          %472 = sbr.rel (%p470) target = $region40
        $region39: #{tpu_custom_call.1} parent=35 // pred_region
          %s473 = smul.u32 2, %s23
          %475 = vsyncadd %s466, 0
          %s476 = smul.addr %s22, 4
          %s477 = sadd.s32 %s473, %s476
          %s478 = smul.addr %s477, 8
          %s479 = scalar_lea.hbm %s4, %s478
          %s480 = sshll.u32 %s469, 4
          %s481 = int_to_ptr.vmem [resolvable:$true] %s480
          %s482 = sshll.u32 %s479, 4
          %s483 = int_to_ptr.hbm [resolvable:$true] %s482
          %488 = dma.vmem_to_hbm [thread:$0]  %s481, 512, %s483, %s466, 256, 256, 16
        $region40: #{tpu_custom_call.1} parent=35 // pred_fallthru
          _
      $region36: #{tpu_custom_call.1} parent=5 // pred_fallthru
        _
      %p489 = scmp.le.s32.totalorder 2, %s13
      // Predicated region
      $region41: #{tpu_custom_call.1} parent=5 // pred_check
        %p490 = pneg %p489
      $region42: #{tpu_custom_call.1} parent=5 // pred_check_branch
        %492 = sbr.rel (%p490) target = $region44
      $region43: #{tpu_custom_call.1} parent=5 // pred_region
        %s493 = ssub.s32 %s13, 2
        // Predicated region
        $region45: #{tpu_custom_call.1} parent=43 // pred_check
          %p494 = pneg %p154
        $region46: #{tpu_custom_call.1} parent=43 // pred_check_branch
          %496 = sbr.rel (%p494) target = $region48
        $region47: #{tpu_custom_call.1} parent=43 // pred_region
          %s497 = sand.u32 %s139, 1
          %s498 = scalar_lea.sflag [#allocation3], %s497
          %s499 = sand.u32 %s139, 1
          %s500 = smul.addr %s499, 32
          %s501 = scalar_lea.vmem [#allocation2], %s500
          %503 = dma.done %s498, 512
        $region48: #{tpu_custom_call.1} parent=43 // pred_fallthru
          _
      $region44: #{tpu_custom_call.1} parent=5 // pred_fallthru
        _
    $region6: #{tpu_custom_call.1} parent=1 // loop_footer
      %s17 = sadd.s32 1, %s13
    $region7: #{tpu_custom_call.1} parent=1 // loop_footer_branch
      %12 = sbr.rel target = $region3
    $region8: #{tpu_custom_call.1} parent=1 // loop_exit
      _
    %504 = vsyncpa [#allocation3], 1
    %s505 = scalar_lea.sflag [#allocation3], 1
    %506 = vsyncpa %s505, 1

</llo_original>
